<compile_context>
chip_gen: v5e
topology: v5e:2x2
jax: 0.10.0
libtpu: 0.0.40
codegen_flags: <defaults>
</compile_context>

<pallas_src>
import functools

import jax
import jax.numpy as jnp
from jax.experimental import pallas as pl
from jax.experimental.pallas import tpu as pltpu

HIDDEN = 512          # fc1 width, matches nn.Linear(state_dim, 512)
LANE = 128            # TPU lane width
NEG_INF = -1e30       # bias pad for unused output lanes (exp(pad) == 0)


def _round_up(x, m):
    return (x + m - 1) // m * m


def policy_forward_kernel(x_ref, w1_ref, b1_ref, w2_ref, b2_ref, o_ref):
    """One batch tile of softmax(relu(x @ W1 + b1) @ W2 + b2, axis=-1).

    x_ref : (TB, state_dim)     state rows
    w1_ref: (state_dim, HIDDEN) fc1 weight (stored (in, out))
    b1_ref: (1, HIDDEN)         fc1 bias
    w2_ref: (HIDDEN, OUT_PAD)   fc2 weight, zero-padded lanes
    b2_ref: (1, OUT_PAD)        fc2 bias, NEG_INF in padded lanes
    o_ref : (TB, OUT_PAD)       softmax probs (padded lanes == 0)
    """
    # fc1 + ReLU  -- MXU matmul with f32 accumulate, bias broadcast-add on VPU.
    h = jnp.dot(x_ref[...], w1_ref[...], preferred_element_type=jnp.float32)
    h = jnp.maximum(h + b1_ref[...], 0.0)

    # fc2 -- lane-dense (OUT_PAD = multiple of 128) MXU matmul.
    logits = jnp.dot(h, w2_ref[...], preferred_element_type=jnp.float32)
    logits = logits + b2_ref[...]

    # Numerically stable softmax along lanes; padded lanes carry -1e30 -> exp = 0,
    # so max / denominator are identical to the un-padded softmax.
    m = jnp.max(logits, axis=-1, keepdims=True)
    e = jnp.exp(logits - m)
    denom = jnp.sum(e, axis=-1, keepdims=True)
    o_ref[...] = (e * pl.reciprocal(denom, approx=False)).astype(o_ref.dtype)


def pack_params(w1, b1, w2, b2):
    """Lay out parameters once (reuse every step); only W2/b2 get lane padding.

    w1: (state_dim, HIDDEN), b1: (HIDDEN,), w2: (HIDDEN, action_space), b2: (action_space,)
    (weights are stored transposed vs. torch, i.e. (in, out), so the kernel does x @ W)
    """
    hidden, action_space = w2.shape
    out_pad = _round_up(action_space, LANE)

    w1_p = w1.astype(jnp.float32)
    b1_p = b1.reshape(1, hidden).astype(jnp.float32)

    w2_p = jnp.zeros((hidden, out_pad), jnp.float32)
    w2_p = w2_p.at[:, :action_space].set(w2.astype(jnp.float32))

    b2_p = jnp.full((1, out_pad), NEG_INF, jnp.float32)
    b2_p = b2_p.at[0, :action_space].set(b2.reshape(-1).astype(jnp.float32))
    return w1_p, b1_p, w2_p, b2_p


@functools.partial(jax.jit, static_argnames=("action_space",))
def policy_forward(state, w1_p, b1_p, w2_p, b2_p, *, action_space):
    """state: (B, state_dim) f32. Returns softmax probs; squeezes axis 0 iff B == 1."""
    B, state_dim = state.shape
    hidden = w1_p.shape[1]
    out_pad = w2_p.shape[1]

    # Small batches (the typical RL per-step call) go through a single
    # full-array block -> zero wrapper-side padding / reshaping ops.
    # Large rollout batches are tiled into 128-row MXU tiles on a 1-D grid;
    # a partial final tile is handled by Pallas (OOB reads are per-row
    # independent, OOB writes dropped).
    if B <= 128:
        tb, grid_b = B, 1
    else:
        tb, grid_b = 128, pl.cdiv(B, 128)

    out = pl.pallas_call(
        policy_forward_kernel,
        out_shape=jax.ShapeDtypeStruct((B, out_pad), jnp.float32),
        grid=(grid_b,),
        in_specs=[
            pl.BlockSpec((tb, state_dim), lambda i: (i, 0)),      # stream state tiles
            pl.BlockSpec((state_dim, hidden), lambda i: (0, 0)),  # W1: VMEM-resident
            pl.BlockSpec((1, hidden), lambda i: (0, 0)),          # b1: VMEM-resident
            pl.BlockSpec((hidden, out_pad), lambda i: (0, 0)),    # W2: VMEM-resident
            pl.BlockSpec((1, out_pad), lambda i: (0, 0)),         # b2: VMEM-resident
        ],
        out_specs=pl.BlockSpec((tb, out_pad), lambda i: (i, 0)),
        compiler_params=pltpu.CompilerParams(
            dimension_semantics=("parallel",)),  # v7x: split batch tiles across TCs
    )(state.astype(jnp.float32), w1_p, b1_p, w2_p, b2_p)

    out = out[:, :action_space]
    # torch .squeeze(0): only drops the batch dim when it is 1 (static shape).
    if B == 1:
        out = jnp.squeeze(out, axis=0)
    return out


def init_params(key, state_dim, action_space, hidden=HIDDEN):
    """Deterministic init matching nn.Linear's U(-1/sqrt(fan_in), 1/sqrt(fan_in))."""
    k1, k2, k3, k4 = jax.random.split(key, 4)
    bound1 = 1.0 / jnp.sqrt(jnp.float32(state_dim))
    bound2 = 1.0 / jnp.sqrt(jnp.float32(hidden))
    w1 = jax.random.uniform(k1, (state_dim, hidden), jnp.float32, -bound1, bound1)
    b1 = jax.random.uniform(k2, (hidden,), jnp.float32, -bound1, bound1)
    w2 = jax.random.uniform(k3, (hidden, action_space), jnp.float32, -bound2, bound2)
    b2 = jax.random.uniform(k4, (action_space,), jnp.float32, -bound2, bound2)
    return w1, b1, w2, b2


# TODO(synk): the torch module's optimizer/update() (Adam + REINFORCE loss + backward)
# is training-side and is not implemented here; only forward() is translated.


if __name__ == "__main__":
    key = jax.random.PRNGKey(0)
    k_params, k_state, k_big = jax.random.split(key, 3)

    B, STATE_DIM, ACTION_SPACE = 2, 32, 8
    w1, b1, w2, b2 = init_params(k_params, STATE_DIM, ACTION_SPACE)
    w1_p, b1_p, w2_p, b2_p = pack_params(w1, b1, w2, b2)   # pack once, reuse every step

    # --- small batch (matches the module's typical per-step call) ---
    state = jax.random.normal(k_state, (B, STATE_DIM), jnp.float32)
    probs = policy_forward(state, w1_p, b1_p, w2_p, b2_p, action_space=ACTION_SPACE)
    probs = jax.block_until_ready(probs)

    ref = jax.nn.softmax(jnp.maximum(state @ w1 + b1, 0.0) @ w2 + b2, axis=-1)
    assert probs.shape == (B, ACTION_SPACE)
    assert jnp.allclose(probs, ref, atol=1e-5, rtol=1e-5)
    assert jnp.allclose(jnp.sum(probs, axis=-1), 1.0, atol=1e-5)

    # --- B == 1 exercises the .squeeze(0) semantics ---
    probs1 = policy_forward(state[:1], w1_p, b1_p, w2_p, b2_p, action_space=ACTION_SPACE)
    probs1 = jax.block_until_ready(probs1)
    assert probs1.shape == (ACTION_SPACE,)
    assert jnp.allclose(probs1, ref[0], atol=1e-5, rtol=1e-5)

    # --- batched rollout path: 256 states -> 2 grid steps of 128 rows,
    #     weights/biases stay VMEM-resident across tiles ---
    big_state = jax.random.normal(k_big, (256, STATE_DIM), jnp.float32)
    big = policy_forward(big_state, w1_p, b1_p, w2_p, b2_p, action_space=ACTION_SPACE)
    big = jax.block_until_ready(big)
    big_ref = jax.nn.softmax(jnp.maximum(big_state @ w1 + b1, 0.0) @ w2 + b2, axis=-1)
    assert big.shape == (256, ACTION_SPACE)
    assert jnp.allclose(big, big_ref, atol=1e-5, rtol=1e-5)

    print("KERNEL_OK")
</pallas_src>

<mosaic_0001>
module attributes {stable_mosaic.version = 11 : i64} {
  func.func @policy_forward_kernel(%arg0: i32, %arg1: memref<2x32xf32, #tpu.memory_space<vmem>>, %arg2: memref<32x512xf32, #tpu.memory_space<vmem>>, %arg3: memref<1x512xf32, #tpu.memory_space<vmem>>, %arg4: memref<512x128xf32, #tpu.memory_space<vmem>>, %arg5: memref<1x128xf32, #tpu.memory_space<vmem>>, %arg6: memref<2x128xf32, #tpu.memory_space<vmem>>) attributes {dimension_semantics = [#tpu.dimension_semantics<parallel>], iteration_bounds = array<i64: 1>, scalar_prefetch = 0 : i64, scratch_operands = 0 : i64, tpu.core_type = #tpu.core_type<tc>, window_params = [{transform_indices = @transform_0, window_bounds = array<i64: 2, 32>}, {pipeline_mode = #tpu.pipeline_mode<synchronous>, transform_indices = @transform_1, window_bounds = array<i64: 32, 512>}, {pipeline_mode = #tpu.pipeline_mode<synchronous>, transform_indices = @transform_2, window_bounds = array<i64: 1, 512>}, {pipeline_mode = #tpu.pipeline_mode<synchronous>, transform_indices = @transform_3, window_bounds = array<i64: 512, 128>}, {pipeline_mode = #tpu.pipeline_mode<synchronous>, transform_indices = @transform_4, window_bounds = array<i64: 1, 128>}, {transform_indices = @transform_5, window_bounds = array<i64: 2, 128>}]} {
    %c0 = arith.constant 0 : index
    %c0_0 = arith.constant 0 : index
    %0 = vector.load %arg1[%c0, %c0_0] : memref<2x32xf32, #tpu.memory_space<vmem>>, vector<2x32xf32>
    %c0_1 = arith.constant 0 : index
    %c0_2 = arith.constant 0 : index
    %1 = vector.load %arg2[%c0_1, %c0_2] : memref<32x512xf32, #tpu.memory_space<vmem>>, vector<32x512xf32>
    %cst = arith.constant dense<0.000000e+00> : vector<2x512xf32>
    %2 = tpu.matmul %0, %1, %cst {dimension_numbers = #tpu.dot_dimension_numbers<[1], [0], [0], [1], [0, 0, 1, 1], [], []>} : vector<2x32xf32>, vector<32x512xf32>, vector<2x512xf32> -> vector<2x512xf32>
    %c0_3 = arith.constant 0 : index
    %c0_4 = arith.constant 0 : index
    %3 = vector.load %arg3[%c0_3, %c0_4] : memref<1x512xf32, #tpu.memory_space<vmem>>, vector<1x512xf32>
    %4 = vector.broadcast %3 : vector<1x512xf32> to vector<2x512xf32>
    %5 = arith.addf %2, %4 : vector<2x512xf32>
    %cst_5 = arith.constant 0.000000e+00 : f32
    %6 = vector.broadcast %cst_5 : f32 to vector<2x512xf32>
    %7 = arith.maximumf %5, %6 : vector<2x512xf32>
    %c0_6 = arith.constant 0 : index
    %c0_7 = arith.constant 0 : index
    %8 = vector.load %arg4[%c0_6, %c0_7] : memref<512x128xf32, #tpu.memory_space<vmem>>, vector<512x128xf32>
    %cst_8 = arith.constant dense<0.000000e+00> : vector<2x128xf32>
    %9 = tpu.matmul %7, %8, %cst_8 {dimension_numbers = #tpu.dot_dimension_numbers<[1], [0], [0], [1], [0, 0, 1, 1], [], []>} : vector<2x512xf32>, vector<512x128xf32>, vector<2x128xf32> -> vector<2x128xf32>
    %c0_9 = arith.constant 0 : index
    %c0_10 = arith.constant 0 : index
    %10 = vector.load %arg5[%c0_9, %c0_10] : memref<1x128xf32, #tpu.memory_space<vmem>>, vector<1x128xf32>
    %11 = vector.broadcast %10 : vector<1x128xf32> to vector<2x128xf32>
    %12 = arith.addf %9, %11 : vector<2x128xf32>
    %cst_11 = arith.constant dense<0xFF800000> : vector<2xf32>
    %13 = vector.multi_reduction <maximumf>, %12, %cst_11 [1] : vector<2x128xf32> to vector<2xf32>
    %14 = vector.shape_cast %13 : vector<2xf32> to vector<2x1xf32>
    %15 = vector.broadcast %14 : vector<2x1xf32> to vector<2x128xf32>
    %16 = arith.subf %12, %15 : vector<2x128xf32>
    %17 = math.exp %16 : vector<2x128xf32>
    %cst_12 = arith.constant dense<0.000000e+00> : vector<2xf32>
    %18 = vector.multi_reduction <add>, %17, %cst_12 [1] : vector<2x128xf32> to vector<2xf32>
    %19 = vector.shape_cast %18 : vector<2xf32> to vector<2x1xf32>
    %20 = tpu.reciprocal %19 : vector<2x1xf32> -> vector<2x1xf32>
    %21 = vector.broadcast %20 : vector<2x1xf32> to vector<2x128xf32>
    %22 = arith.mulf %17, %21 : vector<2x128xf32>
    %c0_13 = arith.constant 0 : index
    %c0_14 = arith.constant 0 : index
    %23 = vector.load %arg6[%c0_13, %c0_14] : memref<2x128xf32, #tpu.memory_space<vmem>>, vector<2x128xf32>
    tpu.vector_store %arg6[%c0_13, %c0_14], %22 {strides = array<i32>} : memref<2x128xf32, #tpu.memory_space<vmem>>, vector<2x128xf32>,
    return
  }
  func.func @transform_0(%arg0: i32) -> (i32, i32) {
    %c0_i32 = arith.constant 0 : i32
    %c0_i32_0 = arith.constant 0 : i32
    return %arg0, %c0_i32 : i32, i32
  }
  func.func @transform_1(%arg0: i32) -> (i32, i32) {
    %c0_i32 = arith.constant 0 : i32
    %c0_i32_0 = arith.constant 0 : i32
    %c0_i32_1 = arith.constant 0 : i32
    return %c0_i32, %c0_i32_0 : i32, i32
  }
  func.func @transform_2(%arg0: i32) -> (i32, i32) {
    %c0_i32 = arith.constant 0 : i32
    %c0_i32_0 = arith.constant 0 : i32
    %c0_i32_1 = arith.constant 0 : i32
    return %c0_i32, %c0_i32_0 : i32, i32
  }
  func.func @transform_3(%arg0: i32) -> (i32, i32) {
    %c0_i32 = arith.constant 0 : i32
    %c0_i32_0 = arith.constant 0 : i32
    %c0_i32_1 = arith.constant 0 : i32
    return %c0_i32, %c0_i32_0 : i32, i32
  }
  func.func @transform_4(%arg0: i32) -> (i32, i32) {
    %c0_i32 = arith.constant 0 : i32
    %c0_i32_0 = arith.constant 0 : i32
    %c0_i32_1 = arith.constant 0 : i32
    return %c0_i32, %c0_i32_0 : i32, i32
  }
  func.func @transform_5(%arg0: i32) -> (i32, i32) {
    %c0_i32 = arith.constant 0 : i32
    %c0_i32_0 = arith.constant 0 : i32
    return %arg0, %c0_i32 : i32, i32
  }
}

</mosaic_0001>

<llo_original>
// kernel: policy_forward.1
$region0: #{policy_forward.1}
  #allocation0 [shape = 'u32[]', space=smem, size = 0x4, offset = 0x4, fixed_abs, tag = 'smem constant byte address 0x4 - core index']
  #allocation1 [shape = 'u32[72,128]{1,0:T(1,128)}', space=vmem, size = 0x9000, scoped, tag = 'internal scratch']
  %s0 = inlined_call_operand.hbm [shape: f32[2,32], index: 0, kind: input, shape index: {}]
  %s1 = inlined_call_operand.hbm [shape: f32[32,512], index: 1, kind: input, shape index: {}]
  %s2 = inlined_call_operand.hbm [shape: f32[1,512], index: 2, kind: input, shape index: {}]
  %s3 = inlined_call_operand.hbm [shape: f32[512,128], index: 3, kind: input, shape index: {}]
  %s4 = inlined_call_operand.vmem [shape: f32[1,128], index: 4, kind: input, shape index: {}]
  %s5 = inlined_call_operand.hbm [shape: f32[2,128], index: 5, kind: output, shape index: {}]
  %s6 = sld [smem:[#allocation0]]
  $region46: #{policy_forward.1} parent=0
    _
  %s8 = ssub.s32 1, %s6
  %s9 = scalar_select 0, %s8, %s6
  $region1: #{policy_forward.1} parent=0
    #allocation2 [shape = 'u8[1024]{0}', space=vmem, size = 0x400, scoped, tag = 'input window, operand 0, single buffered']
    #allocation3 [shape = 's32[1]{0}', space=sflag, size = 0x4, scoped, tag = 'scoped memory for policy_forward.1']
    #allocation4 [shape = 's32[1]{0}', space=sflag, size = 0x4, scoped, tag = 'scoped memory for policy_forward.1']
    #allocation5 [shape = 'u8[65536]{0}', space=vmem, size = 0x10000, scoped, tag = 'input window, operand 1, single buffered']
    #allocation6 [shape = 's32[1]{0}', space=sflag, size = 0x4, scoped, tag = 'scoped memory for policy_forward.1']
    #allocation7 [shape = 'u8[2048]{0}', space=vmem, size = 0x800, scoped, tag = 'input window, operand 2, single buffered']
    #allocation8 [shape = 'u8[262144]{0}', space=vmem, size = 0x40000, scoped, tag = 'input window, operand 3, single buffered']
    #allocation9 [shape = 's32[1]{0}', space=sflag, size = 0x4, scoped, tag = 'scoped memory for policy_forward.1']
    #allocation10 [shape = 'u8[1024]{0}', space=vmem, size = 0x400, scoped, tag = 'output window, operand 0, single buffered']
    %10 = vsyncpa [#allocation3], 0
    %11 = vsyncpa [#allocation6], 0
    %12 = vsyncpa [#allocation9], 0
    %13 = vsyncpa [#allocation4], 0
    // Predicated region
    $region2: #{policy_forward.1} parent=1 // pred_check
      _
    $region3: #{policy_forward.1} parent=1 // pred_check_branch
      %15 = sbr.rel (0) target = $region5
    $region4: #{policy_forward.1} parent=1 // pred_region
      %17 = vsyncadd [#allocation3], 0
      %s19 = sshll.u32 %s0, 4
      %s20 = int_to_ptr.hbm [resolvable:$true] %s19
      %s21 = sshll.u32 [#allocation2], 4
      %s22 = int_to_ptr.vmem [resolvable:$true] %s21
      %24 = dma.hbm_to_vmem [thread:$0]  %s20, 32, %s22, [#allocation3]
    $region5: #{policy_forward.1} parent=1 // pred_fallthru
      _
    // Predicated region
    $region6: #{policy_forward.1} parent=1 // pred_check
      _
    $region7: #{policy_forward.1} parent=1 // pred_check_branch
      %26 = sbr.rel (0) target = $region9
    $region8: #{policy_forward.1} parent=1 // pred_region
      %28 = vsyncadd [#allocation6], 0
      %s29 = sshll.u32 %s1, 4
      %s30 = int_to_ptr.hbm [resolvable:$true] %s29
      %s31 = sshll.u32 [#allocation5], 4
      %s32 = int_to_ptr.vmem [resolvable:$true] %s31
      %37 = dma.hbm_to_vmem [thread:$0]  %s30, 2048, %s32, [#allocation6], 512, 512, 32
    $region9: #{policy_forward.1} parent=1 // pred_fallthru
      _
    // Predicated region
    $region10: #{policy_forward.1} parent=1 // pred_check
      _
    $region11: #{policy_forward.1} parent=1 // pred_check_branch
      %39 = sbr.rel (0) target = $region13
    $region12: #{policy_forward.1} parent=1 // pred_region
      %41 = vsyncadd [#allocation6], 0
      %s43 = sshll.u32 %s2, 4
      %s44 = int_to_ptr.hbm [resolvable:$true] %s43
      %s45 = sshll.u32 [#allocation7], 4
      %s46 = int_to_ptr.vmem [resolvable:$true] %s45
      %48 = dma.hbm_to_vmem [thread:$0]  %s44, 64, %s46, [#allocation6]
    $region13: #{policy_forward.1} parent=1 // pred_fallthru
      _
    // Predicated region
    $region14: #{policy_forward.1} parent=1 // pred_check
      _
    $region15: #{policy_forward.1} parent=1 // pred_check_branch
      %50 = sbr.rel (0) target = $region17
    $region16: #{policy_forward.1} parent=1 // pred_region
      %52 = vsyncadd [#allocation9], 0
      %s53 = sshll.u32 %s3, 4
      %s54 = int_to_ptr.hbm [resolvable:$true] %s53
      %s55 = sshll.u32 [#allocation8], 4
      %s56 = int_to_ptr.vmem [resolvable:$true] %s55
      %61 = dma.hbm_to_vmem [thread:$0]  %s54, 8192, %s56, [#allocation9], 128, 128, 8
    $region17: #{policy_forward.1} parent=1 // pred_fallthru
      _
    // Predicated region
    $region18: #{policy_forward.1} parent=1 // pred_check
      _
    $region19: #{policy_forward.1} parent=1 // pred_check_branch
      %63 = sbr.rel (0) target = $region21
    $region20: #{policy_forward.1} parent=1 // pred_region
      _
    $region21: #{policy_forward.1} parent=1 // pred_fallthru
      _
    // Predicated region
    $region22: #{policy_forward.1} parent=1 // pred_check
      _
    $region23: #{policy_forward.1} parent=1 // pred_check_branch
      %65 = sbr.rel (0) target = $region25
    $region24: #{policy_forward.1} parent=1 // pred_region
      %67 = dma.done [#allocation3], 32
    $region25: #{policy_forward.1} parent=1 // pred_fallthru
      _
    // Predicated region
    $region26: #{policy_forward.1} parent=1 // pred_check
      _
    $region27: #{policy_forward.1} parent=1 // pred_check_branch
      %69 = sbr.rel (0) target = $region29
    $region28: #{policy_forward.1} parent=1 // pred_region
      %71 = dma.done [#allocation6], 2048
    $region29: #{policy_forward.1} parent=1 // pred_fallthru
      _
    // Predicated region
    $region30: #{policy_forward.1} parent=1 // pred_check
      _
    $region31: #{policy_forward.1} parent=1 // pred_check_branch
      %73 = sbr.rel (0) target = $region33
    $region32: #{policy_forward.1} parent=1 // pred_region
      %75 = dma.done [#allocation6], 64
    $region33: #{policy_forward.1} parent=1 // pred_fallthru
      _
    // Predicated region
    $region34: #{policy_forward.1} parent=1 // pred_check
      _
    $region35: #{policy_forward.1} parent=1 // pred_check_branch
      %77 = sbr.rel (0) target = $region37
    $region36: #{policy_forward.1} parent=1 // pred_region
      %79 = dma.done [#allocation9], 8192
    $region37: #{policy_forward.1} parent=1 // pred_fallthru
      _
    %v80 = vld [vmem:[#allocation2] sm:$0x3]
    %v81 = vld [vmem:[#allocation5] sm:$0xff]
    %v82 = vld [vmem:[#allocation5 + $0x8] sm:$0xff]
    %v83 = vld [vmem:[#allocation5 + $0x10] sm:$0xff]
    %v84 = vld [vmem:[#allocation5 + $0x18] sm:$0xff]
    %v85 = vld [vmem:[#allocation5 + $0x20] sm:$0xff]
    %v86 = vld [vmem:[#allocation5 + $0x28] sm:$0xff]
    %v87 = vld [vmem:[#allocation5 + $0x30] sm:$0xff]
    %v88 = vld [vmem:[#allocation5 + $0x38] sm:$0xff]
    %v89 = vld [vmem:[#allocation5 + $0x40] sm:$0xff]
    %v90 = vld [vmem:[#allocation5 + $0x48] sm:$0xff]
    %v91 = vld [vmem:[#allocation5 + $0x50] sm:$0xff]
    %v92 = vld [vmem:[#allocation5 + $0x58] sm:$0xff]
    %v93 = vld [vmem:[#allocation5 + $0x60] sm:$0xff]
    %v94 = vld [vmem:[#allocation5 + $0x68] sm:$0xff]
    %v95 = vld [vmem:[#allocation5 + $0x70] sm:$0xff]
    %v96 = vld [vmem:[#allocation5 + $0x78] sm:$0xff]
    %v97 = vld [vmem:[#allocation7] sm:$0xf]
    %v99 = vperm.slane %v97, 0
    %v100 = vperm.slane %v97, 1
    %v101 = vperm.slane %v97, 2
    %v102 = vperm.slane %v97, 3
    %vm107 = vcmask 261120
    %v109 = vsel %vm107, %v80, 0
    %111 = vmatpush.msra.mxu0 0.0
    %112 = vmatpush.msra.mxu0 0.0
    %113 = vmatpush.msra.mxu0 0.0
    %114 = vmatpush.msra.mxu0 0.0
    %115 = vmatpush.msra.mxu0 0.0
    %116 = vmatpush.msra.mxu0 0.0
    %117 = vmatpush.msra.mxu0 0.0
    %118 = vmatpush.msra.mxu0 0.0
    %119 = vmatpush.msra.mxu0 0.0
    %120 = vmatpush.msra.mxu0 0.0
    %121 = vmatpush.msra.mxu0 0.0
    %122 = vmatpush.msra.mxu0 0.0
    %123 = vmatpush.msra.mxu0 %v93
    %124 = vmatpush.msra.mxu0 %v89
    %125 = vmatpush.msra.mxu0 %v85
    %126 = vmatpush.msra.mxu0 %v81
    %127 = vmatmul.f32.gmra.mxu0 %v109
    %v128 = vpop.f32.mrf.mxu0
    %v129 = vadd.f32 %v99, %v128
    %130 = vdwg.mxu0
    %131 = vmatpush.msra.mxu0 0.0
    %132 = vmatpush.msra.mxu0 0.0
    %133 = vmatpush.msra.mxu0 0.0
    %134 = vmatpush.msra.mxu0 0.0
    %135 = vmatpush.msra.mxu0 0.0
    %136 = vmatpush.msra.mxu0 0.0
    %137 = vmatpush.msra.mxu0 0.0
    %138 = vmatpush.msra.mxu0 0.0
    %139 = vmatpush.msra.mxu0 0.0
    %140 = vmatpush.msra.mxu0 0.0
    %141 = vmatpush.msra.mxu0 0.0
    %142 = vmatpush.msra.mxu0 0.0
    %143 = vmatpush.msra.mxu0 %v94
    %144 = vmatpush.msra.mxu0 %v90
    %145 = vmatpush.msra.mxu0 %v86
    %146 = vmatpush.msra.mxu0 %v82
    %147 = vmatmul.f32.gmra.mxu0 %v109
    %v148 = vpop.f32.mrf.mxu0
    %v149 = vadd.f32 %v100, %v148
    %150 = vdwg.mxu0
    %151 = vmatpush.msra.mxu0 0.0
    %152 = vmatpush.msra.mxu0 0.0
    %153 = vmatpush.msra.mxu0 0.0
    %154 = vmatpush.msra.mxu0 0.0
    %155 = vmatpush.msra.mxu0 0.0
    %156 = vmatpush.msra.mxu0 0.0
    %157 = vmatpush.msra.mxu0 0.0
    %158 = vmatpush.msra.mxu0 0.0
    %159 = vmatpush.msra.mxu0 0.0
    %160 = vmatpush.msra.mxu0 0.0
    %161 = vmatpush.msra.mxu0 0.0
    %162 = vmatpush.msra.mxu0 0.0
    %163 = vmatpush.msra.mxu0 %v95
    %164 = vmatpush.msra.mxu0 %v91
    %165 = vmatpush.msra.mxu0 %v87
    %166 = vmatpush.msra.mxu0 %v83
    %167 = vmatmul.f32.gmra.mxu0 %v109
    %v168 = vpop.f32.mrf.mxu0
    %v169 = vadd.f32 %v101, %v168
    %170 = vdwg.mxu0
    %171 = vmatpush.msra.mxu0 0.0
    %172 = vmatpush.msra.mxu0 0.0
    %173 = vmatpush.msra.mxu0 0.0
    %174 = vmatpush.msra.mxu0 0.0
    %175 = vmatpush.msra.mxu0 0.0
    %176 = vmatpush.msra.mxu0 0.0
    %177 = vmatpush.msra.mxu0 0.0
    %178 = vmatpush.msra.mxu0 0.0
    %179 = vmatpush.msra.mxu0 0.0
    %180 = vmatpush.msra.mxu0 0.0
    %181 = vmatpush.msra.mxu0 0.0
    %182 = vmatpush.msra.mxu0 0.0
    %183 = vmatpush.msra.mxu0 %v96
    %184 = vmatpush.msra.mxu0 %v92
    %185 = vmatpush.msra.mxu0 %v88
    %186 = vmatpush.msra.mxu0 %v84
    %187 = vmatmul.f32.gmra.mxu0 %v109
    %v188 = vpop.f32.mrf.mxu0
    %v189 = vadd.f32 %v102, %v188
    %190 = vdwg.mxu0
    %v191 = vmax.f32 %v129, 0.0
    %v192 = vmax.f32 %v149, 0.0
    %v193 = vmax.f32 %v169, 0.0
    %v194 = vmax.f32 %v189, 0.0
    %v195 = vld [vmem:[#allocation8] sm:$0xff]
    %v196 = vld [vmem:[#allocation8 + $0x8] sm:$0xff]
    %v197 = vld [vmem:[#allocation8 + $0x10] sm:$0xff]
    %v198 = vld [vmem:[#allocation8 + $0x18] sm:$0xff]
    %v199 = vld [vmem:[#allocation8 + $0x20] sm:$0xff]
    %v200 = vld [vmem:[#allocation8 + $0x28] sm:$0xff]
    %v201 = vld [vmem:[#allocation8 + $0x30] sm:$0xff]
    %v202 = vld [vmem:[#allocation8 + $0x38] sm:$0xff]
    %v203 = vld [vmem:[#allocation8 + $0x40] sm:$0xff]
    %v204 = vld [vmem:[#allocation8 + $0x48] sm:$0xff]
    %v205 = vld [vmem:[#allocation8 + $0x50] sm:$0xff]
    %v206 = vld [vmem:[#allocation8 + $0x58] sm:$0xff]
    %v207 = vld [vmem:[#allocation8 + $0x60] sm:$0xff]
    %v208 = vld [vmem:[#allocation8 + $0x68] sm:$0xff]
    %v209 = vld [vmem:[#allocation8 + $0x70] sm:$0xff]
    %v210 = vld [vmem:[#allocation8 + $0x78] sm:$0xff]
    %v211 = vld [vmem:[#allocation8 + $0x80] sm:$0xff]
    %v212 = vld [vmem:[#allocation8 + $0x88] sm:$0xff]
    %v213 = vld [vmem:[#allocation8 + $0x90] sm:$0xff]
    %v214 = vld [vmem:[#allocation8 + $0x98] sm:$0xff]
    %v215 = vld [vmem:[#allocation8 + $0xa0] sm:$0xff]
    %v216 = vld [vmem:[#allocation8 + $0xa8] sm:$0xff]
    %v217 = vld [vmem:[#allocation8 + $0xb0] sm:$0xff]
    %v218 = vld [vmem:[#allocation8 + $0xb8] sm:$0xff]
    %v219 = vld [vmem:[#allocation8 + $0xc0] sm:$0xff]
    %v220 = vld [vmem:[#allocation8 + $0xc8] sm:$0xff]
    %v221 = vld [vmem:[#allocation8 + $0xd0] sm:$0xff]
    %v222 = vld [vmem:[#allocation8 + $0xd8] sm:$0xff]
    %v223 = vld [vmem:[#allocation8 + $0xe0] sm:$0xff]
    %v224 = vld [vmem:[#allocation8 + $0xe8] sm:$0xff]
    %v225 = vld [vmem:[#allocation8 + $0xf0] sm:$0xff]
    %v226 = vld [vmem:[#allocation8 + $0xf8] sm:$0xff]
    %v227 = vld [vmem:[#allocation8 + $0x100] sm:$0xff]
    %v228 = vld [vmem:[#allocation8 + $0x108] sm:$0xff]
    %v229 = vld [vmem:[#allocation8 + $0x110] sm:$0xff]
    %v230 = vld [vmem:[#allocation8 + $0x118] sm:$0xff]
    %v231 = vld [vmem:[#allocation8 + $0x120] sm:$0xff]
    %v232 = vld [vmem:[#allocation8 + $0x128] sm:$0xff]
    %v233 = vld [vmem:[#allocation8 + $0x130] sm:$0xff]
    %v234 = vld [vmem:[#allocation8 + $0x138] sm:$0xff]
    %v235 = vld [vmem:[#allocation8 + $0x140] sm:$0xff]
    %v236 = vld [vmem:[#allocation8 + $0x148] sm:$0xff]
    %v237 = vld [vmem:[#allocation8 + $0x150] sm:$0xff]
    %v238 = vld [vmem:[#allocation8 + $0x158] sm:$0xff]
    %v239 = vld [vmem:[#allocation8 + $0x160] sm:$0xff]
    %v240 = vld [vmem:[#allocation8 + $0x168] sm:$0xff]
    %v241 = vld [vmem:[#allocation8 + $0x170] sm:$0xff]
    %v242 = vld [vmem:[#allocation8 + $0x178] sm:$0xff]
    %v243 = vld [vmem:[#allocation8 + $0x180] sm:$0xff]
    %v244 = vld [vmem:[#allocation8 + $0x188] sm:$0xff]
    %v245 = vld [vmem:[#allocation8 + $0x190] sm:$0xff]
    %v246 = vld [vmem:[#allocation8 + $0x198] sm:$0xff]
    %v247 = vld [vmem:[#allocation8 + $0x1a0] sm:$0xff]
    %v248 = vld [vmem:[#allocation8 + $0x1a8] sm:$0xff]
    %v249 = vld [vmem:[#allocation8 + $0x1b0] sm:$0xff]
    %v250 = vld [vmem:[#allocation8 + $0x1b8] sm:$0xff]
    %v251 = vld [vmem:[#allocation8 + $0x1c0] sm:$0xff]
    %v252 = vld [vmem:[#allocation8 + $0x1c8] sm:$0xff]
    %v253 = vld [vmem:[#allocation8 + $0x1d0] sm:$0xff]
    %v254 = vld [vmem:[#allocation8 + $0x1d8] sm:$0xff]
    %v255 = vld [vmem:[#allocation8 + $0x1e0] sm:$0xff]
    %v256 = vld [vmem:[#allocation8 + $0x1e8] sm:$0xff]
    %v257 = vld [vmem:[#allocation8 + $0x1f0] sm:$0xff]
    %v258 = vld [vmem:[#allocation8 + $0x1f8] sm:$0xff]
    %v259 = vld [vmem:[%s4] sm:$0x1]
    %v261 = vperm.slane %v259, 0
    %263 = vmatpush.msra.mxu0 %v210
    %264 = vmatpush.msra.mxu0 %v209
    %265 = vmatpush.msra.mxu0 %v208
    %266 = vmatpush.msra.mxu0 %v207
    %267 = vmatpush.msra.mxu0 %v206
    %268 = vmatpush.msra.mxu0 %v205
    %269 = vmatpush.msra.mxu0 %v204
    %270 = vmatpush.msra.mxu0 %v203
    %271 = vmatpush.msra.mxu0 %v202
    %272 = vmatpush.msra.mxu0 %v201
    %273 = vmatpush.msra.mxu0 %v200
    %274 = vmatpush.msra.mxu0 %v199
    %275 = vmatpush.msra.mxu0 %v198
    %276 = vmatpush.msra.mxu0 %v197
    %277 = vmatpush.msra.mxu0 %v196
    %278 = vmatpush.msra.mxu0 %v195
    %279 = vmatmul.f32.gmra.mxu0 %v191
    %v280 = vpop.f32.mrf.mxu0
    %v281 = vadd.f32 %v261, %v280
    %282 = vdwg.mxu0
    %283 = vmatpush.msra.mxu0 %v226
    %284 = vmatpush.msra.mxu0 %v225
    %285 = vmatpush.msra.mxu0 %v224
    %286 = vmatpush.msra.mxu0 %v223
    %287 = vmatpush.msra.mxu0 %v222
    %288 = vmatpush.msra.mxu0 %v221
    %289 = vmatpush.msra.mxu0 %v220
    %290 = vmatpush.msra.mxu0 %v219
    %291 = vmatpush.msra.mxu0 %v218
    %292 = vmatpush.msra.mxu0 %v217
    %293 = vmatpush.msra.mxu0 %v216
    %294 = vmatpush.msra.mxu0 %v215
    %295 = vmatpush.msra.mxu0 %v214
    %296 = vmatpush.msra.mxu0 %v213
    %297 = vmatpush.msra.mxu0 %v212
    %298 = vmatpush.msra.mxu0 %v211
    %299 = vmatmul.f32.gmra.mxu0 %v192
    %v300 = vpop.f32.mrf.mxu0
    %v301 = vadd.f32 %v281, %v300
    %302 = vdwg.mxu0
    %303 = vmatpush.msra.mxu0 %v242
    %304 = vmatpush.msra.mxu0 %v241
    %305 = vmatpush.msra.mxu0 %v240
    %306 = vmatpush.msra.mxu0 %v239
    %307 = vmatpush.msra.mxu0 %v238
    %308 = vmatpush.msra.mxu0 %v237
    %309 = vmatpush.msra.mxu0 %v236
    %310 = vmatpush.msra.mxu0 %v235
    %311 = vmatpush.msra.mxu0 %v234
    %312 = vmatpush.msra.mxu0 %v233
    %313 = vmatpush.msra.mxu0 %v232
    %314 = vmatpush.msra.mxu0 %v231
    %315 = vmatpush.msra.mxu0 %v230
    %316 = vmatpush.msra.mxu0 %v229
    %317 = vmatpush.msra.mxu0 %v228
    %318 = vmatpush.msra.mxu0 %v227
    %319 = vmatmul.f32.gmra.mxu0 %v193
    %v320 = vpop.f32.mrf.mxu0
    %v321 = vadd.f32 %v301, %v320
    %322 = vdwg.mxu0
    %323 = vmatpush.msra.mxu0 %v258
    %324 = vmatpush.msra.mxu0 %v257
    %325 = vmatpush.msra.mxu0 %v256
    %326 = vmatpush.msra.mxu0 %v255
    %327 = vmatpush.msra.mxu0 %v254
    %328 = vmatpush.msra.mxu0 %v253
    %329 = vmatpush.msra.mxu0 %v252
    %330 = vmatpush.msra.mxu0 %v251
    %331 = vmatpush.msra.mxu0 %v250
    %332 = vmatpush.msra.mxu0 %v249
    %333 = vmatpush.msra.mxu0 %v248
    %334 = vmatpush.msra.mxu0 %v247
    %335 = vmatpush.msra.mxu0 %v246
    %336 = vmatpush.msra.mxu0 %v245
    %337 = vmatpush.msra.mxu0 %v244
    %338 = vmatpush.msra.mxu0 %v243
    %339 = vmatmul.f32.gmra.mxu0 %v194
    %v340 = vpop.f32.mrf.mxu0
    %v341 = vadd.f32 %v321, %v340
    %342 = vdwg.mxu0
    %vm343 = vcmask 1041408
    %v344 = vsel %vm343, %v341, -inf
    %345 = vmax.xlane.f32.xlu0 %v344
    %v346 = vpop.xlane.xlu0 %345
    %v347 = vsub.f32 %v341, %v346
    %v348 = vmul.f32 %v347, 1.442695
    %v349 = vpow.pop %v348
    %v350 = vsel %vm343, %v349, 0.0
    %351 = vadd.xlane.f32.xlu0 %v350
    %v352 = vpop.xlane.xlu0 %351
    %v353 = vrcp.pop %v352
    %v354 = vmul.f32 %v352, %v353
    %v355 = vsub.f32 1.0, %v354
    %v356 = vmul.f32 %v353, %v355
    %v357 = vadd.f32 %v353, %v356
    %vm358 = vweird.f32 %v352
    %vm359 = vweird.f32 %v353
    %vm360 = vmor %vm358, %vm359
    %v361 = vsel %vm360, %v353, %v357
    %v362 = vand.u32 2147483647, %v352
    %vm363 = vcmp.eq.f32.partialorder %v362, 8.507059e+37
    %v364 = vand.u32 %v352, 2147483648
    %v365 = vor.u32 1.1754944e-38, %v364
    %v366 = vsel %vm363, %v365, %v361
    %v367 = vmul.f32 %v349, %v366
    %368 = vst [vmem:[#allocation10] sm:$0x3] %v367
    // Predicated region
    $region38: #{policy_forward.1} parent=1 // pred_check
      _
    $region39: #{policy_forward.1} parent=1 // pred_check_branch
      %370 = sbr.rel (0) target = $region41
    $region40: #{policy_forward.1} parent=1 // pred_region
      %372 = vsyncadd [#allocation4], 0
      %s374 = sshll.u32 [#allocation10], 4
      %s375 = int_to_ptr.vmem [resolvable:$true] %s374
      %s376 = sshll.u32 %s5, 4
      %s377 = int_to_ptr.hbm [resolvable:$true] %s376
      %379 = dma.vmem_to_hbm [thread:$0]  %s375, 32, %s377, [#allocation4]
    $region41: #{policy_forward.1} parent=1 // pred_fallthru
      _
    // Predicated region
    $region42: #{policy_forward.1} parent=1 // pred_check
      _
    $region43: #{policy_forward.1} parent=1 // pred_check_branch
      %381 = sbr.rel (0) target = $region45
    $region44: #{policy_forward.1} parent=1 // pred_region
      %383 = dma.done [#allocation4], 32
    $region45: #{policy_forward.1} parent=1 // pred_fallthru
      _
    %384 = vsyncpa [#allocation3], 1
    %385 = vsyncpa [#allocation6], 1
    %386 = vsyncpa [#allocation9], 1
    %387 = vsyncpa [#allocation4], 1

</llo_original>
